<compile_context>
chip_gen: v6e
topology: v6e:2x2x1
jax: 0.10.0
libtpu: 0.0.40
codegen_flags: <defaults>
</compile_context>

<pallas_src>
import numpy as np
import jax
import jax.numpy as jnp
from jax import lax
from jax.experimental import pallas as pl
from jax.experimental.pallas import tpu as pltpu

# Problem sizes (consistent with the module's shape contract).
N = 2
CIN = 4
CMID = 8
COUT = CMID            # BasicBlock: out_channels = mid_channels
H = W = 16
EPS = 1e-5

NH = N * H             # 32  : matmul M dim (one row per (batch, image-row))
WC = W * COUT          # 128 : lane-dense activation width (W * channels)
K1 = 3 * W * CIN       # 192 : in_conv contraction (3 row-taps x W x CIN)
K2 = W * CMID          # 128 : out_conv contraction (W x CMID)

# Matmul-input dtype (accumulation is always f32). Set to jnp.float32 for
# near-bit-exact agreement with the reference.
COMPUTE_DTYPE = jnp.bfloat16


def basic_block_kernel(p1_ref, w1_ref, b1_ref, w2_ref, s_ref, bf_ref, out_ref):
    """Whole BasicBlock forward for the fused batch in a single grid step."""
    # ---- in_conv (3x3, BN scale folded) + 1x1 skip (BN scale folded): 1 matmul
    y1 = jnp.dot(p1_ref[...], w1_ref[...],
                 preferred_element_type=jnp.float32)            # (NH, 2*WC) f32
    mid = jnp.maximum(y1[:, :WC] + b1_ref[...], 0.0)            # BN bias + ReLU
    skip = y1[:, WC:]                                           # skip conv * ssk

    # ---- out_conv: one matmul producing the 3 kh partial sums side by side
    t = jnp.dot(mid.astype(COMPUTE_DTYPE), w2_ref[...],
                preferred_element_type=jnp.float32)             # (NH, 3*WC) f32

    # +/-1 image-row shifts (zeroed across batch/image boundaries) expressed as
    # tiny banded matmuls: stays dense on the MXU, no scratch / relayouts.
    y2 = (jnp.dot(s_ref[0], t[:, :WC], preferred_element_type=jnp.float32)
          + t[:, WC:2 * WC]
          + jnp.dot(s_ref[1], t[:, 2 * WC:], preferred_element_type=jnp.float32))

    # ---- residual add + (b2 + bsk) bias + final ReLU; (32,128) unmasked store
    out_ref[...] = jnp.maximum(y2 + skip + bf_ref[...], 0.0)


def basic_block_pallas(x_nchw, params):
    """x_nchw: (N, CIN, H, W) float32 -> (N, COUT, H, W) float32."""
    x = jnp.transpose(x_nchw, (0, 2, 3, 1)).astype(jnp.float32)     # NHWC
    xr = x.reshape(N, H, W * CIN)                                    # lane-dense rows
    xz = jnp.pad(xr, ((0, 0), (1, 1), (0, 0)))                       # zero H-halo
    # Row-im2col: row (n,h) = [x row h-1 | x row h | x row h+1], each W*CIN wide.
    p1 = jnp.concatenate([xz[:, 0:H], xz[:, 1:H + 1], xz[:, 2:H + 2]], axis=-1)
    p1 = p1.reshape(NH, K1).astype(COMPUTE_DTYPE)

    out = pl.pallas_call(
        basic_block_kernel,
        out_shape=jax.ShapeDtypeStruct((NH, WC), jnp.float32),
        grid_spec=pltpu.PrefetchScalarGridSpec(
            num_scalar_prefetch=0,
            grid=(1,),    # batch fused; v7x alternative: grid=(N,) + "parallel"
            in_specs=[
                pl.BlockSpec((NH, K1), lambda i: (0, 0)),         # p1 patches
                pl.BlockSpec((K1, 2 * WC), lambda i: (0, 0)),     # w1 (+ skip cols)
                pl.BlockSpec((1, WC), lambda i: (0, 0)),          # b1 (tiled over W)
                pl.BlockSpec((K2, 3 * WC), lambda i: (0, 0)),     # w2 (3 kh bands)
                pl.BlockSpec((2, NH, NH), lambda i: (0, 0, 0)),   # row-shift mats
                pl.BlockSpec((1, WC), lambda i: (0, 0)),          # b2 + bsk
            ],
            out_specs=pl.BlockSpec((NH, WC), lambda i: (0, 0)),
        ),
        compiler_params=pltpu.CompilerParams(
            dimension_semantics=("arbitrary",)),
    )(p1, params["w1"], params["b1"], params["w2"], params["shift"], params["bf"])

    out = out.reshape(N, H, W, COUT)
    return jnp.transpose(out, (0, 3, 1, 2))                          # NHWC -> NCHW


# ---------------- parameter construction / packing (deterministic) -------------
def fold_bn(gamma, beta, mean, var):
    scale = gamma / jnp.sqrt(var + EPS)
    return scale, beta - mean * scale


def _band3x3(w_oihw, scale, width):
    """(Cout,Cin,3,3) BN-scaled conv weights -> 3 block-banded matrices, one per
    kh tap, each (width*Cin, width*Cout): rows = (w_in, ci), cols = (w_out, co)."""
    w = np.asarray(w_oihw, np.float32) * np.asarray(scale, np.float32)[:, None, None, None]
    cout, cin = w.shape[0], w.shape[1]
    bands = []
    for kh in range(3):
        a = np.zeros((width * cin, width * cout), np.float32)
        for w_out in range(width):
            for kw in range(3):
                w_in = w_out + kw - 1
                if 0 <= w_in < width:
                    a[w_in * cin:(w_in + 1) * cin,
                      w_out * cout:(w_out + 1) * cout] = w[:, :, kh, kw].T
        bands.append(a)
    return bands


def _blockdiag1x1(w_oihw, scale, width):
    """(Cout,Cin,1,1) BN-scaled 1x1 conv -> block-diagonal (width*Cin, width*Cout)."""
    w = (np.asarray(w_oihw, np.float32)[:, :, 0, 0] *
         np.asarray(scale, np.float32)[:, None]).T                  # (cin, cout)
    cin, cout = w.shape
    a = np.zeros((width * cin, width * cout), np.float32)
    for i in range(width):
        a[i * cin:(i + 1) * cin, i * cout:(i + 1) * cout] = w
    return a


def make_params(key):
    ks = jax.random.split(key, 6)
    # PyTorch conv weights are OIHW.
    w1_oihw = 0.1 * jax.random.normal(ks[0], (CMID, CIN, 3, 3), jnp.float32)
    w2_oihw = 0.1 * jax.random.normal(ks[1], (COUT, CMID, 3, 3), jnp.float32)
    wsk_oihw = 0.1 * jax.random.normal(ks[2], (COUT, CIN, 1, 1), jnp.float32)

    def bn_params(k, c):
        k1, k2, k3, k4 = jax.random.split(k, 4)
        gamma = 1.0 + 0.1 * jax.random.normal(k1, (c,), jnp.float32)
        beta = 0.1 * jax.random.normal(k2, (c,), jnp.float32)
        mean = 0.1 * jax.random.normal(k3, (c,), jnp.float32)
        var = 1.0 + 0.1 * jnp.abs(jax.random.normal(k4, (c,), jnp.float32))
        return gamma, beta, mean, var

    bn1 = bn_params(ks[3], CMID)
    bn2 = bn_params(ks[4], COUT)
    bns = bn_params(ks[5], COUT)
    s1, b1 = fold_bn(*bn1)
    s2, b2 = fold_bn(*bn2)
    ssk, bsk = fold_bn(*bns)

    # in_conv as a (K1, WC) banded matrix (kh bands stacked along K), with the
    # 1x1 skip conv appended as 128 extra output columns (centre row chunk only).
    c1_0, c1_1, c1_2 = _band3x3(w1_oihw, s1, W)                 # each (W*CIN, WC)
    w1_conv = np.concatenate([c1_0, c1_1, c1_2], axis=0)        # (K1, WC)
    w1_skip = np.zeros((K1, WC), np.float32)
    w1_skip[W * CIN:2 * W * CIN, :] = _blockdiag1x1(wsk_oihw, ssk, W)
    w1_full = np.concatenate([w1_conv, w1_skip], axis=1)        # (K1, 2*WC)

    # out_conv: the three kh bands side by side along the output columns.
    c2_0, c2_1, c2_2 = _band3x3(w2_oihw, s2, W)                 # each (K2, WC)
    w2_full = np.concatenate([c2_0, c2_1, c2_2], axis=1)        # (K2, 3*WC)

    # Row-shift matrices: output row (n,h) picks partial-sum row (n,h-1)/(n,h+1);
    # zero past the top/bottom of each image (handles the batch fusion too).
    shift = np.zeros((2, NH, NH), np.float32)
    for n in range(N):
        for h in range(H):
            r = n * H + h
            if h - 1 >= 0:
                shift[0, r, r - 1] = 1.0
            if h + 1 < H:
                shift[1, r, r + 1] = 1.0

    b1_row = np.tile(np.asarray(b1, np.float32), W).reshape(1, WC)
    bf_row = (np.tile(np.asarray(b2, np.float32), W) +
              np.tile(np.asarray(bsk, np.float32), W)).reshape(1, WC)

    return {
        "w1": jnp.asarray(w1_full, COMPUTE_DTYPE),
        "w2": jnp.asarray(w2_full, COMPUTE_DTYPE),
        "shift": jnp.asarray(shift, jnp.float32),
        "b1": jnp.asarray(b1_row, jnp.float32),
        "bf": jnp.asarray(bf_row, jnp.float32),
        # raw weights / BN folds for the pure-JAX reference
        "_w1_oihw": w1_oihw, "_w2_oihw": w2_oihw, "_wsk_oihw": wsk_oihw,
        "_s1": s1, "_b1": b1, "_s2": s2, "_b2": b2, "_ssk": ssk, "_bsk": bsk,
    }


# ---------------- pure-JAX reference (for sanity checking) ----------------
def _ref_conv(x_nhwc, w_oihw, padding):
    w_hwio = jnp.transpose(w_oihw, (2, 3, 1, 0))
    return lax.conv_general_dilated(
        x_nhwc, w_hwio, window_strides=(1, 1),
        padding=[(padding, padding), (padding, padding)],
        dimension_numbers=("NHWC", "HWIO", "NHWC"),
        precision=lax.Precision.HIGHEST)


def basic_block_ref(x_nchw, p):
    x = jnp.transpose(x_nchw, (0, 2, 3, 1)).astype(jnp.float32)
    mid = jnp.maximum(_ref_conv(x, p["_w1_oihw"], 1) * p["_s1"] + p["_b1"], 0.0)
    y2 = _ref_conv(mid, p["_w2_oihw"], 1) * p["_s2"] + p["_b2"]
    res = _ref_conv(x, p["_wsk_oihw"], 0) * p["_ssk"] + p["_bsk"]
    return jnp.transpose(jnp.maximum(y2 + res, 0.0), (0, 3, 1, 2))


if __name__ == "__main__":
    key = jax.random.PRNGKey(0)
    kx, kp = jax.random.split(key)
    x = jax.random.normal(kx, (N, CIN, H, W), jnp.float32)   # NCHW, as in PyTorch
    params = make_params(kp)

    out = jax.block_until_ready(basic_block_pallas(x, params))
    ref = jax.block_until_ready(basic_block_ref(x, params))

    assert out.shape == (N, COUT, H, W), out.shape
    # bf16 matmul inputs introduce ~1e-2-scale rounding on O(1) outputs; with
    # COMPUTE_DTYPE = jnp.float32 the error is < 1e-4.
    tol = 5e-2 if COMPUTE_DTYPE == jnp.bfloat16 else 1e-4
    err = float(jnp.max(jnp.abs(out - ref)))
    assert err < tol, err
    print("KERNEL_OK")
</pallas_src>

<mosaic_0001>
module attributes {stable_mosaic.version = 11 : i64} {
  func.func @basic_block_kernel(%arg0: i32, %arg1: memref<32x192xbf16, #tpu.memory_space<vmem>>, %arg2: memref<192x256xbf16, #tpu.memory_space<vmem>>, %arg3: memref<1x128xf32, #tpu.memory_space<vmem>>, %arg4: memref<128x384xbf16, #tpu.memory_space<vmem>>, %arg5: memref<2x32x32xf32, #tpu.memory_space<vmem>>, %arg6: memref<1x128xf32, #tpu.memory_space<vmem>>, %arg7: memref<32x128xf32, #tpu.memory_space<vmem>>) attributes {dimension_semantics = [#tpu.dimension_semantics<arbitrary>], iteration_bounds = array<i64: 1>, scalar_prefetch = 0 : i64, scratch_operands = 0 : i64, tpu.core_type = #tpu.core_type<tc>, window_params = [{pipeline_mode = #tpu.pipeline_mode<synchronous>, transform_indices = @transform_0, window_bounds = array<i64: 32, 192>}, {pipeline_mode = #tpu.pipeline_mode<synchronous>, transform_indices = @transform_1, window_bounds = array<i64: 192, 256>}, {pipeline_mode = #tpu.pipeline_mode<synchronous>, transform_indices = @transform_2, window_bounds = array<i64: 1, 128>}, {pipeline_mode = #tpu.pipeline_mode<synchronous>, transform_indices = @transform_3, window_bounds = array<i64: 128, 384>}, {pipeline_mode = #tpu.pipeline_mode<synchronous>, transform_indices = @transform_4, window_bounds = array<i64: 2, 32, 32>}, {pipeline_mode = #tpu.pipeline_mode<synchronous>, transform_indices = @transform_5, window_bounds = array<i64: 1, 128>}, {pipeline_mode = #tpu.pipeline_mode<synchronous>, transform_indices = @transform_6, window_bounds = array<i64: 32, 128>}]} {
    %c0 = arith.constant 0 : index
    %c0_0 = arith.constant 0 : index
    %0 = vector.load %arg1[%c0, %c0_0] : memref<32x192xbf16, #tpu.memory_space<vmem>>, vector<32x192xbf16>
    %c0_1 = arith.constant 0 : index
    %c0_2 = arith.constant 0 : index
    %1 = vector.load %arg2[%c0_1, %c0_2] : memref<192x256xbf16, #tpu.memory_space<vmem>>, vector<192x256xbf16>
    %cst = arith.constant dense<0.000000e+00> : vector<32x256xf32>
    %2 = tpu.matmul %0, %1, %cst {dimension_numbers = #tpu.dot_dimension_numbers<[1], [0], [0], [1], [0, 0, 1, 1], [], []>} : vector<32x192xbf16>, vector<192x256xbf16>, vector<32x256xf32> -> vector<32x256xf32>
    %3 = vector.extract_strided_slice %2 {offsets = [0, 0], sizes = [32, 128], strides = [1, 1]} : vector<32x256xf32> to vector<32x128xf32>
    %c0_3 = arith.constant 0 : index
    %c0_4 = arith.constant 0 : index
    %4 = vector.load %arg3[%c0_3, %c0_4] : memref<1x128xf32, #tpu.memory_space<vmem>>, vector<1x128xf32>
    %5 = vector.broadcast %4 : vector<1x128xf32> to vector<32x128xf32>
    %6 = arith.addf %3, %5 : vector<32x128xf32>
    %cst_5 = arith.constant 0.000000e+00 : f32
    %7 = vector.broadcast %cst_5 : f32 to vector<32x128xf32>
    %8 = arith.maximumf %6, %7 : vector<32x128xf32>
    %9 = vector.extract_strided_slice %2 {offsets = [0, 128], sizes = [32, 128], strides = [1, 1]} : vector<32x256xf32> to vector<32x128xf32>
    %10 = arith.truncf %8 : vector<32x128xf32> to vector<32x128xbf16>
    %c0_6 = arith.constant 0 : index
    %c0_7 = arith.constant 0 : index
    %11 = vector.load %arg4[%c0_6, %c0_7] : memref<128x384xbf16, #tpu.memory_space<vmem>>, vector<128x384xbf16>
    %cst_8 = arith.constant dense<0.000000e+00> : vector<32x384xf32>
    %12 = tpu.matmul %10, %11, %cst_8 {dimension_numbers = #tpu.dot_dimension_numbers<[1], [0], [0], [1], [0, 0, 1, 1], [], []>} : vector<32x128xbf16>, vector<128x384xbf16>, vector<32x384xf32> -> vector<32x384xf32>
    %c0_9 = arith.constant 0 : index
    %c0_10 = arith.constant 0 : index
    %c0_11 = arith.constant 0 : index
    %13 = vector.load %arg5[%c0_9, %c0_10, %c0_11] : memref<2x32x32xf32, #tpu.memory_space<vmem>>, vector<1x32x32xf32>
    %14 = vector.shape_cast %13 : vector<1x32x32xf32> to vector<32x32xf32>
    %15 = vector.extract_strided_slice %12 {offsets = [0, 0], sizes = [32, 128], strides = [1, 1]} : vector<32x384xf32> to vector<32x128xf32>
    %cst_12 = arith.constant dense<0.000000e+00> : vector<32x128xf32>
    %16 = tpu.matmul %14, %15, %cst_12 {dimension_numbers = #tpu.dot_dimension_numbers<[1], [0], [0], [1], [0, 0, 1, 1], [], []>} : vector<32x32xf32>, vector<32x128xf32>, vector<32x128xf32> -> vector<32x128xf32>
    %17 = vector.extract_strided_slice %12 {offsets = [0, 128], sizes = [32, 128], strides = [1, 1]} : vector<32x384xf32> to vector<32x128xf32>
    %18 = arith.addf %16, %17 : vector<32x128xf32>
    %c1 = arith.constant 1 : index
    %c0_13 = arith.constant 0 : index
    %c0_14 = arith.constant 0 : index
    %19 = vector.load %arg5[%c1, %c0_13, %c0_14] : memref<2x32x32xf32, #tpu.memory_space<vmem>>, vector<1x32x32xf32>
    %20 = vector.shape_cast %19 : vector<1x32x32xf32> to vector<32x32xf32>
    %21 = vector.extract_strided_slice %12 {offsets = [0, 256], sizes = [32, 128], strides = [1, 1]} : vector<32x384xf32> to vector<32x128xf32>
    %cst_15 = arith.constant dense<0.000000e+00> : vector<32x128xf32>
    %22 = tpu.matmul %20, %21, %cst_15 {dimension_numbers = #tpu.dot_dimension_numbers<[1], [0], [0], [1], [0, 0, 1, 1], [], []>} : vector<32x32xf32>, vector<32x128xf32>, vector<32x128xf32> -> vector<32x128xf32>
    %23 = arith.addf %18, %22 : vector<32x128xf32>
    %24 = arith.addf %23, %9 : vector<32x128xf32>
    %c0_16 = arith.constant 0 : index
    %c0_17 = arith.constant 0 : index
    %25 = vector.load %arg6[%c0_16, %c0_17] : memref<1x128xf32, #tpu.memory_space<vmem>>, vector<1x128xf32>
    %26 = vector.broadcast %25 : vector<1x128xf32> to vector<32x128xf32>
    %27 = arith.addf %24, %26 : vector<32x128xf32>
    %cst_18 = arith.constant 0.000000e+00 : f32
    %28 = vector.broadcast %cst_18 : f32 to vector<32x128xf32>
    %29 = arith.maximumf %27, %28 : vector<32x128xf32>
    %c0_19 = arith.constant 0 : index
    %c0_20 = arith.constant 0 : index
    %30 = vector.load %arg7[%c0_19, %c0_20] : memref<32x128xf32, #tpu.memory_space<vmem>>, vector<32x128xf32>
    tpu.vector_store %arg7[%c0_19, %c0_20], %29 {strides = array<i32>} : memref<32x128xf32, #tpu.memory_space<vmem>>, vector<32x128xf32>,
    return
  }
  func.func @transform_0(%arg0: i32) -> (i32, i32) {
    %c0_i32 = arith.constant 0 : i32
    %c0_i32_0 = arith.constant 0 : i32
    %c0_i32_1 = arith.constant 0 : i32
    return %c0_i32, %c0_i32_0 : i32, i32
  }
  func.func @transform_1(%arg0: i32) -> (i32, i32) {
    %c0_i32 = arith.constant 0 : i32
    %c0_i32_0 = arith.constant 0 : i32
    %c0_i32_1 = arith.constant 0 : i32
    return %c0_i32, %c0_i32_0 : i32, i32
  }
  func.func @transform_2(%arg0: i32) -> (i32, i32) {
    %c0_i32 = arith.constant 0 : i32
    %c0_i32_0 = arith.constant 0 : i32
    %c0_i32_1 = arith.constant 0 : i32
    return %c0_i32, %c0_i32_0 : i32, i32
  }
  func.func @transform_3(%arg0: i32) -> (i32, i32) {
    %c0_i32 = arith.constant 0 : i32
    %c0_i32_0 = arith.constant 0 : i32
    %c0_i32_1 = arith.constant 0 : i32
    return %c0_i32, %c0_i32_0 : i32, i32
  }
  func.func @transform_4(%arg0: i32) -> (i32, i32, i32) {
    %c0_i32 = arith.constant 0 : i32
    %c0_i32_0 = arith.constant 0 : i32
    %c0_i32_1 = arith.constant 0 : i32
    %c0_i32_2 = arith.constant 0 : i32
    return %c0_i32, %c0_i32_0, %c0_i32_1 : i32, i32, i32
  }
  func.func @transform_5(%arg0: i32) -> (i32, i32) {
    %c0_i32 = arith.constant 0 : i32
    %c0_i32_0 = arith.constant 0 : i32
    %c0_i32_1 = arith.constant 0 : i32
    return %c0_i32, %c0_i32_0 : i32, i32
  }
  func.func @transform_6(%arg0: i32) -> (i32, i32) {
    %c0_i32 = arith.constant 0 : i32
    %c0_i32_0 = arith.constant 0 : i32
    %c0_i32_1 = arith.constant 0 : i32
    return %c0_i32, %c0_i32_0 : i32, i32
  }
}

</mosaic_0001>

<llo_original>
// kernel: tpu_custom_call.1
$region0: #{tpu_custom_call.1}
  #allocation0 [shape = 'u32[]', space=smem, size = 0x4, offset = 0x4, fixed_abs, tag = 'smem constant byte address 0x4 - core index']
  #allocation1 [shape = 'u32[144,128]{1,0:T(1,128)}', space=vmem, size = 0x12000, scoped, tag = 'internal scratch']
  %s0 = inlined_call_operand.hbm [shape: bf16[32,192], index: 0, kind: input, shape index: {}]
  %s1 = inlined_call_operand.hbm [shape: bf16[192,256], index: 1, kind: input, shape index: {}]
  %s2 = inlined_call_operand.vmem [shape: f32[1,128], index: 2, kind: input, shape index: {}]
  %s3 = inlined_call_operand.hbm [shape: bf16[128,384], index: 3, kind: input, shape index: {}]
  %s4 = inlined_call_operand.hbm [shape: f32[2,32,32], index: 4, kind: input, shape index: {}]
  %s5 = inlined_call_operand.vmem [shape: f32[1,128], index: 5, kind: input, shape index: {}]
  %s6 = inlined_call_operand.hbm [shape: f32[32,128], index: 6, kind: output, shape index: {}]
  %s7 = sld [smem:[#allocation0]]
  $region50: #{tpu_custom_call.1} parent=0
    _
  %s9 = ssub.s32 1, %s7
  %s10 = scalar_select 0, %s9, %s7
  $region1: #{tpu_custom_call.1} parent=0
    #allocation2 [shape = 'u8[16384]{0}', space=vmem, size = 0x4000, scoped, tag = 'input window, operand 0, single buffered']
    #allocation3 [shape = 's32[1]{0}', space=sflag, size = 0x4, scoped, tag = 'scoped memory for tpu_custom_call.1']
    #allocation4 [shape = 's32[1]{0}', space=sflag, size = 0x4, scoped, tag = 'scoped memory for tpu_custom_call.1']
    #allocation5 [shape = 'u8[98304]{0}', space=vmem, size = 0x18000, scoped, tag = 'input window, operand 1, single buffered']
    #allocation6 [shape = 's32[1]{0}', space=sflag, size = 0x4, scoped, tag = 'scoped memory for tpu_custom_call.1']
    #allocation7 [shape = 'u8[98304]{0}', space=vmem, size = 0x18000, scoped, tag = 'input window, operand 3, single buffered']
    #allocation8 [shape = 'u8[32768]{0}', space=vmem, size = 0x8000, scoped, tag = 'input window, operand 4, single buffered']
    #allocation9 [shape = 's32[1]{0}', space=sflag, size = 0x4, scoped, tag = 'scoped memory for tpu_custom_call.1']
    #allocation10 [shape = 'u8[16384]{0}', space=vmem, size = 0x4000, scoped, tag = 'output window, operand 0, single buffered']
    %11 = vsyncpa [#allocation3], 0
    %12 = vsyncpa [#allocation6], 0
    %13 = vsyncpa [#allocation9], 0
    %14 = vsyncpa [#allocation4], 0
    // Predicated region
    $region2: #{tpu_custom_call.1} parent=1 // pred_check
      _
    $region3: #{tpu_custom_call.1} parent=1 // pred_check_branch
      %16 = sbr.rel (0) target = $region5
    $region4: #{tpu_custom_call.1} parent=1 // pred_region
      %s18 = ssub.s32 512, 512
      %19 = vsyncadd [#allocation3], %s18
      %s20 = sshll.u32 [#allocation2], 4
      %s21 = int_to_ptr.vmem [resolvable:$true] %s20
      %26 = dma.hbm_to_vmem [thread:$0]  %s0, 512, %s21, [#allocation3], 128, 128, 8
    $region5: #{tpu_custom_call.1} parent=1 // pred_fallthru
      _
    // Predicated region
    $region6: #{tpu_custom_call.1} parent=1 // pred_check
      _
    $region7: #{tpu_custom_call.1} parent=1 // pred_check_branch
      %28 = sbr.rel (0) target = $region9
    $region8: #{tpu_custom_call.1} parent=1 // pred_region
      %s30 = ssub.s32 3072, 3072
      %31 = vsyncadd [#allocation6], %s30
      %s32 = sshll.u32 [#allocation5], 4
      %s33 = int_to_ptr.vmem [resolvable:$true] %s32
      %38 = dma.hbm_to_vmem [thread:$0]  %s1, 3072, %s33, [#allocation6], 128, 128, 8
    $region9: #{tpu_custom_call.1} parent=1 // pred_fallthru
      _
    // Predicated region
    $region10: #{tpu_custom_call.1} parent=1 // pred_check
      _
    $region11: #{tpu_custom_call.1} parent=1 // pred_check_branch
      %40 = sbr.rel (0) target = $region13
    $region12: #{tpu_custom_call.1} parent=1 // pred_region
      _
    $region13: #{tpu_custom_call.1} parent=1 // pred_fallthru
      _
    // Predicated region
    $region14: #{tpu_custom_call.1} parent=1 // pred_check
      _
    $region15: #{tpu_custom_call.1} parent=1 // pred_check_branch
      %42 = sbr.rel (0) target = $region17
    $region16: #{tpu_custom_call.1} parent=1 // pred_region
      %s44 = ssub.s32 3072, 3072
      %45 = vsyncadd [#allocation6], %s44
      %s46 = sshll.u32 [#allocation7], 4
      %s47 = int_to_ptr.vmem [resolvable:$true] %s46
      %52 = dma.hbm_to_vmem [thread:$0]  %s3, 3072, %s47, [#allocation6], 192, 192, 12
    $region17: #{tpu_custom_call.1} parent=1 // pred_fallthru
      _
    // Predicated region
    $region18: #{tpu_custom_call.1} parent=1 // pred_check
      _
    $region19: #{tpu_custom_call.1} parent=1 // pred_check_branch
      %54 = sbr.rel (0) target = $region21
    $region20: #{tpu_custom_call.1} parent=1 // pred_region
      %s56 = ssub.s32 1024, 1024
      %57 = vsyncadd [#allocation9], %s56
      %s58 = sshll.u32 [#allocation8], 4
      %s59 = int_to_ptr.vmem [resolvable:$true] %s58
      %64 = dma.hbm_to_vmem [thread:$0]  %s4, 1024, %s59, [#allocation9], 128, 128, 8
    $region21: #{tpu_custom_call.1} parent=1 // pred_fallthru
      _
    // Predicated region
    $region22: #{tpu_custom_call.1} parent=1 // pred_check
      _
    $region23: #{tpu_custom_call.1} parent=1 // pred_check_branch
      %66 = sbr.rel (0) target = $region25
    $region24: #{tpu_custom_call.1} parent=1 // pred_region
      _
    $region25: #{tpu_custom_call.1} parent=1 // pred_fallthru
      _
    // Predicated region
    $region26: #{tpu_custom_call.1} parent=1 // pred_check
      _
    $region27: #{tpu_custom_call.1} parent=1 // pred_check_branch
      %68 = sbr.rel (0) target = $region29
    $region28: #{tpu_custom_call.1} parent=1 // pred_region
      %69 = dma.done [#allocation3], 512
    $region29: #{tpu_custom_call.1} parent=1 // pred_fallthru
      _
    // Predicated region
    $region30: #{tpu_custom_call.1} parent=1 // pred_check
      _
    $region31: #{tpu_custom_call.1} parent=1 // pred_check_branch
      %71 = sbr.rel (0) target = $region33
    $region32: #{tpu_custom_call.1} parent=1 // pred_region
      %72 = dma.done [#allocation6], 3072
    $region33: #{tpu_custom_call.1} parent=1 // pred_fallthru
      _
    // Predicated region
    $region34: #{tpu_custom_call.1} parent=1 // pred_check
      _
    $region35: #{tpu_custom_call.1} parent=1 // pred_check_branch
      %74 = sbr.rel (0) target = $region37
    $region36: #{tpu_custom_call.1} parent=1 // pred_region
      %75 = dma.done [#allocation6], 3072
    $region37: #{tpu_custom_call.1} parent=1 // pred_fallthru
      _
    // Predicated region
    $region38: #{tpu_custom_call.1} parent=1 // pred_check
      _
    $region39: #{tpu_custom_call.1} parent=1 // pred_check_branch
      %77 = sbr.rel (0) target = $region41
    $region40: #{tpu_custom_call.1} parent=1 // pred_region
      %78 = dma.done [#allocation9], 1024
    $region41: #{tpu_custom_call.1} parent=1 // pred_fallthru
      _
    %v80 = vld [vmem:[#allocation2] sm:$0xff]
    %v81 = vld [vmem:[#allocation2 + $0x8] sm:$0xff]
    %v82 = vld [vmem:[#allocation2 + $0x10] sm:$0xff]
    %v83 = vld [vmem:[#allocation2 + $0x18] sm:$0xff]
    %v84 = vld [vmem:[#allocation5] sm:$0xff]
    %v85 = vld [vmem:[#allocation5 + $0x8] sm:$0xff]
    %v86 = vld [vmem:[#allocation5 + $0x10] sm:$0xff]
    %v87 = vld [vmem:[#allocation5 + $0x18] sm:$0xff]
    %v88 = vld [vmem:[#allocation5 + $0x20] sm:$0xff]
    %v89 = vld [vmem:[#allocation5 + $0x28] sm:$0xff]
    %v90 = vld [vmem:[#allocation5 + $0x30] sm:$0xff]
    %v91 = vld [vmem:[#allocation5 + $0x38] sm:$0xff]
    %v92 = vld [vmem:[#allocation5 + $0x40] sm:$0xff]
    %v93 = vld [vmem:[#allocation5 + $0x48] sm:$0xff]
    %v94 = vld [vmem:[#allocation5 + $0x50] sm:$0xff]
    %v95 = vld [vmem:[#allocation5 + $0x58] sm:$0xff]
    %v96 = vld [vmem:[#allocation5 + $0x60] sm:$0xff]
    %v97 = vld [vmem:[#allocation5 + $0x68] sm:$0xff]
    %v98 = vld [vmem:[#allocation5 + $0x70] sm:$0xff]
    %v99 = vld [vmem:[#allocation5 + $0x78] sm:$0xff]
    %v100 = vld [vmem:[#allocation5 + $0x80] sm:$0xff]
    %v101 = vld [vmem:[#allocation5 + $0x88] sm:$0xff]
    %v102 = vld [vmem:[#allocation5 + $0x90] sm:$0xff]
    %v103 = vld [vmem:[#allocation5 + $0x98] sm:$0xff]
    %v104 = vld [vmem:[#allocation5 + $0xa0] sm:$0xff]
    %v105 = vld [vmem:[#allocation5 + $0xa8] sm:$0xff]
    %v106 = vld [vmem:[#allocation5 + $0xb0] sm:$0xff]
    %v107 = vld [vmem:[#allocation5 + $0xb8] sm:$0xff]
    %v112 = vunpack.c.l.b16 %v80
    %v113 = vunpack.c.h.b16 %v80
    %v114 = vunpack.c.l.b16 %v81
    %v115 = vunpack.c.h.b16 %v81
    %v116 = vunpack.c.l.b16 %v82
    %v117 = vunpack.c.h.b16 %v82
    %v118 = vunpack.c.l.b16 %v83
    %v119 = vunpack.c.h.b16 %v83
    %v120 = vpack.c.b16 %v114, %v112
    %v121 = vpack.c.b16 %v115, %v113
    %v122 = vpack.c.b16 %v118, %v116
    %v123 = vpack.c.b16 %v119, %v117
    %v150 = vunpack.c.l.b16 %v84
    %v151 = vunpack.c.h.b16 %v84
    %v152 = vunpack.c.l.b16 %v85
    %v153 = vunpack.c.h.b16 %v85
    %v154 = vunpack.c.l.b16 %v86
    %v155 = vunpack.c.h.b16 %v86
    %v156 = vunpack.c.l.b16 %v87
    %v157 = vunpack.c.h.b16 %v87
    %v158 = vunpack.c.l.b16 %v88
    %v159 = vunpack.c.h.b16 %v88
    %v160 = vunpack.c.l.b16 %v89
    %v161 = vunpack.c.h.b16 %v89
    %v162 = vunpack.c.l.b16 %v90
    %v163 = vunpack.c.h.b16 %v90
    %v164 = vunpack.c.l.b16 %v91
    %v165 = vunpack.c.h.b16 %v91
    %v166 = vunpack.c.l.b16 %v92
    %v167 = vunpack.c.h.b16 %v92
    %v168 = vunpack.c.l.b16 %v93
    %v169 = vunpack.c.h.b16 %v93
    %v170 = vunpack.c.l.b16 %v94
    %v171 = vunpack.c.h.b16 %v94
    %v172 = vunpack.c.l.b16 %v95
    %v173 = vunpack.c.h.b16 %v95
    %v174 = vunpack.c.l.b16 %v96
    %v175 = vunpack.c.h.b16 %v96
    %v176 = vunpack.c.l.b16 %v97
    %v177 = vunpack.c.h.b16 %v97
    %v178 = vunpack.c.l.b16 %v98
    %v179 = vunpack.c.h.b16 %v98
    %v180 = vunpack.c.l.b16 %v99
    %v181 = vunpack.c.h.b16 %v99
    %v182 = vunpack.c.l.b16 %v100
    %v183 = vunpack.c.h.b16 %v100
    %v184 = vunpack.c.l.b16 %v101
    %v185 = vunpack.c.h.b16 %v101
    %v186 = vunpack.c.l.b16 %v102
    %v187 = vunpack.c.h.b16 %v102
    %v188 = vunpack.c.l.b16 %v103
    %v189 = vunpack.c.h.b16 %v103
    %v190 = vunpack.c.l.b16 %v104
    %v191 = vunpack.c.h.b16 %v104
    %v192 = vunpack.c.l.b16 %v105
    %v193 = vunpack.c.h.b16 %v105
    %v194 = vunpack.c.l.b16 %v106
    %v195 = vunpack.c.h.b16 %v106
    %v196 = vunpack.c.l.b16 %v107
    %v197 = vunpack.c.h.b16 %v107
    %v198 = vpack.c.b16 %v152, %v150
    %v199 = vpack.c.b16 %v153, %v151
    %v200 = vpack.c.b16 %v156, %v154
    %v201 = vpack.c.b16 %v157, %v155
    %v202 = vpack.c.b16 %v160, %v158
    %v203 = vpack.c.b16 %v161, %v159
    %v204 = vpack.c.b16 %v164, %v162
    %v205 = vpack.c.b16 %v165, %v163
    %v206 = vpack.c.b16 %v168, %v166
    %v207 = vpack.c.b16 %v169, %v167
    %v208 = vpack.c.b16 %v172, %v170
    %v209 = vpack.c.b16 %v173, %v171
    %v210 = vpack.c.b16 %v176, %v174
    %v211 = vpack.c.b16 %v177, %v175
    %v212 = vpack.c.b16 %v180, %v178
    %v213 = vpack.c.b16 %v181, %v179
    %v214 = vpack.c.b16 %v184, %v182
    %v215 = vpack.c.b16 %v185, %v183
    %v216 = vpack.c.b16 %v188, %v186
    %v217 = vpack.c.b16 %v189, %v187
    %v218 = vpack.c.b16 %v192, %v190
    %v219 = vpack.c.b16 %v193, %v191
    %v220 = vpack.c.b16 %v196, %v194
    %v221 = vpack.c.b16 %v197, %v195
    %vm246 = vcmask 523264
    %v248 = vsel %vm246, %v121, 0
    %v251 = vsel %vm246, %v123, 0
    %253 = vmatprep.subr.bf16.mxu0 %v213
    %254 = vmatpush1.bf16.msra.mxu0 %v212
    %255 = vmatprep.subr.bf16.mxu0 %v211
    %256 = vmatpush1.bf16.msra.mxu0 %v210
    %257 = vmatprep.subr.bf16.mxu0 %v209
    %258 = vmatpush1.bf16.msra.mxu0 %v208
    %259 = vmatprep.subr.bf16.mxu0 %v207
    %260 = vmatpush1.bf16.msra.mxu0 %v206
    %261 = vmatprep.subr.bf16.mxu0 %v205
    %262 = vmatpush1.bf16.msra.mxu0 %v204
    %263 = vmatprep.subr.bf16.mxu0 %v203
    %264 = vmatpush1.bf16.msra.mxu0 %v202
    %265 = vmatprep.subr.bf16.mxu0 %v201
    %266 = vmatpush1.bf16.msra.mxu0 %v200
    %267 = vmatprep.subr.bf16.mxu0 %v199
    %268 = vmatpush1.bf16.msra.mxu0 %v198
    %269 = vmatprep.subr.bf16.mxu0 0
    %270 = vmatpush2.bf16.msra.mxu0 0
    %271 = vmatprep.subr.bf16.mxu0 0
    %272 = vmatpush2.bf16.msra.mxu0 0
    %273 = vmatprep.subr.bf16.mxu0 0
    %274 = vmatpush2.bf16.msra.mxu0 0
    %275 = vmatprep.subr.bf16.mxu0 0
    %276 = vmatpush2.bf16.msra.mxu0 0
    %277 = vmatprep.subr.bf16.mxu0 %v221
    %278 = vmatpush2.bf16.msra.mxu0 %v220
    %279 = vmatprep.subr.bf16.mxu0 %v219
    %280 = vmatpush2.bf16.msra.mxu0 %v218
    %281 = vmatprep.subr.bf16.mxu0 %v217
    %282 = vmatpush2.bf16.msra.mxu0 %v216
    %283 = vmatprep.subr.bf16.mxu0 %v215
    %284 = vmatpush2.bf16.msra.mxu0 %v214
    %285 = vmatprep.mubr.bf16.mxu0 %v248
    %286 = vmatmul.mubr.bf16.gmra.mxu0 %v120
    %v287 = vpop.f32.mrf.mxu0
    %v288 = vadd.f32 0.0, %v287
    %v289 = vpop.f32.mrf.mxu0
    %v290 = vadd.f32 0.0, %v289
    %v291 = vpop.f32.mrf.mxu0
    %v292 = vadd.f32 0.0, %v291
    %v293 = vpop.f32.mrf.mxu0
    %v294 = vadd.f32 0.0, %v293
    %295 = vmatprep.mubr.bf16.mxu0 %v251
    %296 = vmatmul.mubr.bf16.gmra.mxu0 %v122
    %v297 = vpop.f32.mrf.mxu0
    %v298 = vadd.f32 0.0, %v297
    %v299 = vpop.f32.mrf.mxu0
    %v300 = vadd.f32 0.0, %v299
    %v301 = vpop.f32.mrf.mxu0
    %v302 = vadd.f32 0.0, %v301
    %v303 = vpop.f32.mrf.mxu0
    %v304 = vadd.f32 0.0, %v303
    %305 = vdwg.mxu0
    %v306 = vld [vmem:[%s2] sm:$0x1]
    %v308 = vlaneseq
    %v309 = vshrl.u32 %v308, 7
    %v310 = vsub.s32 0, %v309
    %v311 = vrot.slane %v306, %v310
    %v313 = vadd.f32 %v288, %v311
    %v314 = vadd.f32 %v292, %v311
    %v315 = vadd.f32 %v298, %v311
    %v316 = vadd.f32 %v302, %v311
    %v317 = vmax.f32 %v313, 0.0
    %v318 = vmax.f32 %v314, 0.0
    %v319 = vmax.f32 %v315, 0.0
    %v320 = vmax.f32 %v316, 0.0
    %v321 = vpack.c.bf16 %v318, %v317
    %v322 = vpack.c.bf16 %v320, %v319
    %v323 = vld [vmem:[#allocation7] sm:$0xff]
    %v324 = vld [vmem:[#allocation7 + $0x8] sm:$0xf]
    %v325 = vld [vmem:[#allocation7 + $0xc] sm:$0xff]
    %v326 = vld [vmem:[#allocation7 + $0x14] sm:$0xf]
    %v327 = vld [vmem:[#allocation7 + $0x18] sm:$0xff]
    %v328 = vld [vmem:[#allocation7 + $0x20] sm:$0xf]
    %v329 = vld [vmem:[#allocation7 + $0x24] sm:$0xff]
    %v330 = vld [vmem:[#allocation7 + $0x2c] sm:$0xf]
    %v331 = vld [vmem:[#allocation7 + $0x30] sm:$0xff]
    %v332 = vld [vmem:[#allocation7 + $0x38] sm:$0xf]
    %v333 = vld [vmem:[#allocation7 + $0x3c] sm:$0xff]
    %v334 = vld [vmem:[#allocation7 + $0x44] sm:$0xf]
    %v335 = vld [vmem:[#allocation7 + $0x48] sm:$0xff]
    %v336 = vld [vmem:[#allocation7 + $0x50] sm:$0xf]
    %v337 = vld [vmem:[#allocation7 + $0x54] sm:$0xff]
    %v338 = vld [vmem:[#allocation7 + $0x5c] sm:$0xf]
    %v339 = vld [vmem:[#allocation7 + $0x60] sm:$0xff]
    %v340 = vld [vmem:[#allocation7 + $0x68] sm:$0xf]
    %v341 = vld [vmem:[#allocation7 + $0x6c] sm:$0xff]
    %v342 = vld [vmem:[#allocation7 + $0x74] sm:$0xf]
    %v343 = vld [vmem:[#allocation7 + $0x78] sm:$0xff]
    %v344 = vld [vmem:[#allocation7 + $0x80] sm:$0xf]
    %v345 = vld [vmem:[#allocation7 + $0x84] sm:$0xff]
    %v346 = vld [vmem:[#allocation7 + $0x8c] sm:$0xf]
    %v347 = vld [vmem:[#allocation7 + $0x90] sm:$0xff]
    %v348 = vld [vmem:[#allocation7 + $0x98] sm:$0xf]
    %v349 = vld [vmem:[#allocation7 + $0x9c] sm:$0xff]
    %v350 = vld [vmem:[#allocation7 + $0xa4] sm:$0xf]
    %v351 = vld [vmem:[#allocation7 + $0xa8] sm:$0xff]
    %v352 = vld [vmem:[#allocation7 + $0xb0] sm:$0xf]
    %v353 = vld [vmem:[#allocation7 + $0xb4] sm:$0xff]
    %v354 = vld [vmem:[#allocation7 + $0xbc] sm:$0xf]
    %v387 = vunpack.c.l.b16 %v323
    %v388 = vunpack.c.h.b16 %v323
    %v389 = vunpack.c.l.b16 %v324
    %v390 = vunpack.c.l.b16 %v325
    %v391 = vunpack.c.h.b16 %v325
    %v392 = vunpack.c.l.b16 %v326
    %v393 = vunpack.c.l.b16 %v327
    %v394 = vunpack.c.h.b16 %v327
    %v395 = vunpack.c.l.b16 %v328
    %v396 = vunpack.c.l.b16 %v329
    %v397 = vunpack.c.h.b16 %v329
    %v398 = vunpack.c.l.b16 %v330
    %v399 = vunpack.c.l.b16 %v331
    %v400 = vunpack.c.h.b16 %v331
    %v401 = vunpack.c.l.b16 %v332
    %v402 = vunpack.c.l.b16 %v333
    %v403 = vunpack.c.h.b16 %v333
    %v404 = vunpack.c.l.b16 %v334
    %v405 = vunpack.c.l.b16 %v335
    %v406 = vunpack.c.h.b16 %v335
    %v407 = vunpack.c.l.b16 %v336
    %v408 = vunpack.c.l.b16 %v337
    %v409 = vunpack.c.h.b16 %v337
    %v410 = vunpack.c.l.b16 %v338
    %v411 = vunpack.c.l.b16 %v339
    %v412 = vunpack.c.h.b16 %v339
    %v413 = vunpack.c.l.b16 %v340
    %v414 = vunpack.c.l.b16 %v341
    %v415 = vunpack.c.h.b16 %v341
    %v416 = vunpack.c.l.b16 %v342
    %v417 = vunpack.c.l.b16 %v343
    %v418 = vunpack.c.h.b16 %v343
    %v419 = vunpack.c.l.b16 %v344
    %v420 = vunpack.c.l.b16 %v345
    %v421 = vunpack.c.h.b16 %v345
    %v422 = vunpack.c.l.b16 %v346
    %v423 = vunpack.c.l.b16 %v347
    %v424 = vunpack.c.h.b16 %v347
    %v425 = vunpack.c.l.b16 %v348
    %v426 = vunpack.c.l.b16 %v349
    %v427 = vunpack.c.h.b16 %v349
    %v428 = vunpack.c.l.b16 %v350
    %v429 = vunpack.c.l.b16 %v351
    %v430 = vunpack.c.h.b16 %v351
    %v431 = vunpack.c.l.b16 %v352
    %v432 = vunpack.c.l.b16 %v353
    %v433 = vunpack.c.h.b16 %v353
    %v434 = vunpack.c.l.b16 %v354
    %v435 = vpack.c.b16 %v390, %v387
    %v436 = vpack.c.b16 %v391, %v388
    %v437 = vpack.c.b16 %v392, %v389
    %v438 = vpack.c.b16 %v396, %v393
    %v439 = vpack.c.b16 %v397, %v394
    %v440 = vpack.c.b16 %v398, %v395
    %v441 = vpack.c.b16 %v402, %v399
    %v442 = vpack.c.b16 %v403, %v400
    %v443 = vpack.c.b16 %v404, %v401
    %v444 = vpack.c.b16 %v408, %v405
    %v445 = vpack.c.b16 %v409, %v406
    %v446 = vpack.c.b16 %v410, %v407
    %v447 = vpack.c.b16 %v414, %v411
    %v448 = vpack.c.b16 %v415, %v412
    %v449 = vpack.c.b16 %v416, %v413
    %v450 = vpack.c.b16 %v420, %v417
    %v451 = vpack.c.b16 %v421, %v418
    %v452 = vpack.c.b16 %v422, %v419
    %v453 = vpack.c.b16 %v426, %v423
    %v454 = vpack.c.b16 %v427, %v424
    %v455 = vpack.c.b16 %v428, %v425
    %v456 = vpack.c.b16 %v432, %v429
    %v457 = vpack.c.b16 %v433, %v430
    %v458 = vpack.c.b16 %v434, %v431
    %483 = vmatprep.subr.bf16.mxu0 %v457
    %484 = vmatpush1.bf16.msra.mxu0 %v456
    %485 = vmatprep.subr.bf16.mxu0 %v454
    %486 = vmatpush1.bf16.msra.mxu0 %v453
    %487 = vmatprep.subr.bf16.mxu0 %v451
    %488 = vmatpush1.bf16.msra.mxu0 %v450
    %489 = vmatprep.subr.bf16.mxu0 %v448
    %490 = vmatpush1.bf16.msra.mxu0 %v447
    %491 = vmatprep.subr.bf16.mxu0 %v445
    %492 = vmatpush1.bf16.msra.mxu0 %v444
    %493 = vmatprep.subr.bf16.mxu0 %v442
    %494 = vmatpush1.bf16.msra.mxu0 %v441
    %495 = vmatprep.subr.bf16.mxu0 %v439
    %496 = vmatpush1.bf16.msra.mxu0 %v438
    %497 = vmatprep.subr.bf16.mxu0 %v436
    %498 = vmatpush1.bf16.msra.mxu0 %v435
    %499 = vmatprep.subr.bf16.mxu0 0
    %500 = vmatpush2.bf16.msra.mxu0 0
    %501 = vmatprep.subr.bf16.mxu0 0
    %502 = vmatpush2.bf16.msra.mxu0 0
    %503 = vmatprep.subr.bf16.mxu0 0
    %504 = vmatpush2.bf16.msra.mxu0 0
    %505 = vmatprep.subr.bf16.mxu0 0
    %506 = vmatpush2.bf16.msra.mxu0 0
    %507 = vmatprep.subr.bf16.mxu0 0
    %508 = vmatpush2.bf16.msra.mxu0 0
    %509 = vmatprep.subr.bf16.mxu0 0
    %510 = vmatpush2.bf16.msra.mxu0 0
    %511 = vmatprep.subr.bf16.mxu0 0
    %512 = vmatpush2.bf16.msra.mxu0 0
    %513 = vmatprep.subr.bf16.mxu0 0
    %514 = vmatpush2.bf16.msra.mxu0 0
    %515 = vmatprep.mubr.bf16.mxu0 0
    %516 = vmatmul.mubr.bf16.gmra.mxu0 %v321
    %v517 = vpop.f32.mrf.mxu0
    %v518 = vadd.f32 0.0, %v517
    %v519 = vpop.f32.mrf.mxu0
    %v520 = vadd.f32 0.0, %v519
    %v521 = vpop.f32.mrf.mxu0
    %v522 = vadd.f32 0.0, %v521
    %v523 = vpop.f32.mrf.mxu0
    %v524 = vadd.f32 0.0, %v523
    %525 = vmatprep.mubr.bf16.mxu0 0
    %526 = vmatmul.mubr.bf16.gmra.mxu0 %v322
    %v527 = vpop.f32.mrf.mxu0
    %v528 = vadd.f32 0.0, %v527
    %v529 = vpop.f32.mrf.mxu0
    %v530 = vadd.f32 0.0, %v529
    %v531 = vpop.f32.mrf.mxu0
    %v532 = vadd.f32 0.0, %v531
    %v533 = vpop.f32.mrf.mxu0
    %v534 = vadd.f32 0.0, %v533
    %535 = vdwg.mxu0
    %536 = vmatprep.subr.bf16.mxu0 0
    %537 = vmatpush1.bf16.msra.mxu0 %v458
    %538 = vmatprep.subr.bf16.mxu0 0
    %539 = vmatpush1.bf16.msra.mxu0 %v455
    %540 = vmatprep.subr.bf16.mxu0 0
    %541 = vmatpush1.bf16.msra.mxu0 %v452
    %542 = vmatprep.subr.bf16.mxu0 0
    %543 = vmatpush1.bf16.msra.mxu0 %v449
    %544 = vmatprep.subr.bf16.mxu0 0
    %545 = vmatpush1.bf16.msra.mxu0 %v446
    %546 = vmatprep.subr.bf16.mxu0 0
    %547 = vmatpush1.bf16.msra.mxu0 %v443
    %548 = vmatprep.subr.bf16.mxu0 0
    %549 = vmatpush1.bf16.msra.mxu0 %v440
    %550 = vmatprep.subr.bf16.mxu0 0
    %551 = vmatpush1.bf16.msra.mxu0 %v437
    %552 = vmatprep.subr.bf16.mxu0 0
    %553 = vmatpush2.bf16.msra.mxu0 0
    %554 = vmatprep.subr.bf16.mxu0 0
    %555 = vmatpush2.bf16.msra.mxu0 0
    %556 = vmatprep.subr.bf16.mxu0 0
    %557 = vmatpush2.bf16.msra.mxu0 0
    %558 = vmatprep.subr.bf16.mxu0 0
    %559 = vmatpush2.bf16.msra.mxu0 0
    %560 = vmatprep.subr.bf16.mxu0 0
    %561 = vmatpush2.bf16.msra.mxu0 0
    %562 = vmatprep.subr.bf16.mxu0 0
    %563 = vmatpush2.bf16.msra.mxu0 0
    %564 = vmatprep.subr.bf16.mxu0 0
    %565 = vmatpush2.bf16.msra.mxu0 0
    %566 = vmatprep.subr.bf16.mxu0 0
    %567 = vmatpush2.bf16.msra.mxu0 0
    %568 = vmatprep.mubr.bf16.mxu0 0
    %569 = vmatmul.mubr.bf16.gmra.mxu0 %v321
    %v570 = vpop.f32.mrf.mxu0
    %v571 = vadd.f32 0.0, %v570
    %v572 = vpop.f32.mrf.mxu0
    %v573 = vpop.f32.mrf.mxu0
    %v574 = vadd.f32 0.0, %v573
    %v575 = vpop.f32.mrf.mxu0
    %576 = vmatprep.mubr.bf16.mxu0 0
    %577 = vmatmul.mubr.bf16.gmra.mxu0 %v322
    %v578 = vpop.f32.mrf.mxu0
    %v579 = vadd.f32 0.0, %v578
    %v580 = vpop.f32.mrf.mxu0
    %v581 = vpop.f32.mrf.mxu0
    %v582 = vadd.f32 0.0, %v581
    %v583 = vpop.f32.mrf.mxu0
    %584 = vdwg.mxu0
    %v585 = vld [vmem:[#allocation8] sm:$0xff]
    %v586 = vld [vmem:[#allocation8 + $0x8] sm:$0xff]
    %v587 = vld [vmem:[#allocation8 + $0x10] sm:$0xff]
    %v588 = vld [vmem:[#allocation8 + $0x18] sm:$0xff]
    %vm589 = vcmask 261120
    %v591 = vsel %vm589, %v585, 0
    %v594 = vsel %vm589, %v586, 0
    %v597 = vsel %vm589, %v587, 0
    %v600 = vsel %vm589, %v588, 0
    %602 = vmatprep.subr.mxu0 0.0
    %603 = vmatpush1.msra.mxu0 0.0
    %604 = vmatprep.subr.mxu0 0.0
    %605 = vmatpush1.msra.mxu0 0.0
    %606 = vmatprep.subr.mxu0 0.0
    %607 = vmatpush1.msra.mxu0 0.0
    %608 = vmatprep.subr.mxu0 0.0
    %609 = vmatpush1.msra.mxu0 0.0
    %610 = vmatprep.subr.mxu0 0.0
    %611 = vmatpush1.msra.mxu0 0.0
    %612 = vmatprep.subr.mxu0 0.0
    %613 = vmatpush1.msra.mxu0 0.0
    %614 = vmatprep.subr.mxu0 0.0
    %615 = vmatpush1.msra.mxu0 0.0
    %616 = vmatprep.subr.mxu0 0.0
    %617 = vmatpush1.msra.mxu0 0.0
    %618 = vmatprep.subr.mxu0 0.0
    %619 = vmatpush1.msra.mxu0 0.0
    %620 = vmatprep.subr.mxu0 0.0
    %621 = vmatpush1.msra.mxu0 0.0
    %622 = vmatprep.subr.mxu0 0.0
    %623 = vmatpush1.msra.mxu0 0.0
    %624 = vmatprep.subr.mxu0 0.0
    %625 = vmatpush1.msra.mxu0 0.0
    %626 = vmatprep.subr.mxu0 0.0
    %627 = vmatpush1.msra.mxu0 %v532
    %628 = vmatprep.subr.mxu0 0.0
    %629 = vmatpush1.msra.mxu0 %v528
    %630 = vmatprep.subr.mxu0 0.0
    %631 = vmatpush1.msra.mxu0 %v522
    %632 = vmatprep.subr.mxu0 0.0
    %633 = vmatpush1.msra.mxu0 %v518
    %634 = vmatprep.subr.mxu0 0.0
    %635 = vmatpush2.msra.mxu0 0.0
    %636 = vmatprep.subr.mxu0 0.0
    %637 = vmatpush2.msra.mxu0 0.0
    %638 = vmatprep.subr.mxu0 0.0
    %639 = vmatpush2.msra.mxu0 0.0
    %640 = vmatprep.subr.mxu0 0.0
    %641 = vmatpush2.msra.mxu0 0.0
    %642 = vmatprep.subr.mxu0 0.0
    %643 = vmatpush2.msra.mxu0 0.0
    %644 = vmatprep.subr.mxu0 0.0
    %645 = vmatpush2.msra.mxu0 0.0
    %646 = vmatprep.subr.mxu0 0.0
    %647 = vmatpush2.msra.mxu0 0.0
    %648 = vmatprep.subr.mxu0 0.0
    %649 = vmatpush2.msra.mxu0 0.0
    %650 = vmatprep.subr.mxu0 0.0
    %651 = vmatpush2.msra.mxu0 0.0
    %652 = vmatprep.subr.mxu0 0.0
    %653 = vmatpush2.msra.mxu0 0.0
    %654 = vmatprep.subr.mxu0 0.0
    %655 = vmatpush2.msra.mxu0 0.0
    %656 = vmatprep.subr.mxu0 0.0
    %657 = vmatpush2.msra.mxu0 0.0
    %658 = vmatprep.subr.mxu0 0.0
    %659 = vmatpush2.msra.mxu0 0.0
    %660 = vmatprep.subr.mxu0 0.0
    %661 = vmatpush2.msra.mxu0 0.0
    %662 = vmatprep.subr.mxu0 0.0
    %663 = vmatpush2.msra.mxu0 0.0
    %664 = vmatprep.subr.mxu0 0.0
    %665 = vmatpush2.msra.mxu0 0.0
    %666 = vmatprep.mubr.f32.mxu0 0.0
    %667 = vmatmul.mubr.f32.gmra.mxu0 %v591
    %v668 = vpop.f32.mrf.mxu0
    %v669 = vadd.f32 %v520, %v668
    %v670 = vpop.f32.mrf.mxu0
    %671 = vmatprep.mubr.f32.mxu0 0.0
    %672 = vmatmul.mubr.f32.gmra.mxu0 %v594
    %v673 = vpop.f32.mrf.mxu0
    %v674 = vadd.f32 %v524, %v673
    %v675 = vpop.f32.mrf.mxu0
    %676 = vmatprep.mubr.f32.mxu0 0.0
    %677 = vmatmul.mubr.f32.gmra.mxu0 %v597
    %v678 = vpop.f32.mrf.mxu0
    %v679 = vadd.f32 %v530, %v678
    %v680 = vpop.f32.mrf.mxu0
    %681 = vmatprep.mubr.f32.mxu0 0.0
    %682 = vmatmul.mubr.f32.gmra.mxu0 %v600
    %v683 = vpop.f32.mrf.mxu0
    %v684 = vadd.f32 %v534, %v683
    %v685 = vpop.f32.mrf.mxu0
    %686 = vdwg.mxu0
    %s687 = scalar_lea.vmem [#allocation8], 32
    %v688 = vld [vmem:[%s687] sm:$0xff]
    %v689 = vld [vmem:[%s687 + $0x8] sm:$0xff]
    %v690 = vld [vmem:[%s687 + $0x10] sm:$0xff]
    %v691 = vld [vmem:[%s687 + $0x18] sm:$0xff]
    %v693 = vsel %vm589, %v688, 0
    %v696 = vsel %vm589, %v689, 0
    %v699 = vsel %vm589, %v690, 0
    %v702 = vsel %vm589, %v691, 0
    %704 = vmatprep.subr.mxu0 0.0
    %705 = vmatpush1.msra.mxu0 0.0
    %706 = vmatprep.subr.mxu0 0.0
    %707 = vmatpush1.msra.mxu0 0.0
    %708 = vmatprep.subr.mxu0 0.0
    %709 = vmatpush1.msra.mxu0 0.0
    %710 = vmatprep.subr.mxu0 0.0
    %711 = vmatpush1.msra.mxu0 0.0
    %712 = vmatprep.subr.mxu0 0.0
    %713 = vmatpush1.msra.mxu0 0.0
    %714 = vmatprep.subr.mxu0 0.0
    %715 = vmatpush1.msra.mxu0 0.0
    %716 = vmatprep.subr.mxu0 0.0
    %717 = vmatpush1.msra.mxu0 0.0
    %718 = vmatprep.subr.mxu0 0.0
    %719 = vmatpush1.msra.mxu0 0.0
    %720 = vmatprep.subr.mxu0 0.0
    %721 = vmatpush1.msra.mxu0 0.0
    %722 = vmatprep.subr.mxu0 0.0
    %723 = vmatpush1.msra.mxu0 0.0
    %724 = vmatprep.subr.mxu0 0.0
    %725 = vmatpush1.msra.mxu0 0.0
    %726 = vmatprep.subr.mxu0 0.0
    %727 = vmatpush1.msra.mxu0 0.0
    %728 = vmatprep.subr.mxu0 0.0
    %729 = vmatpush1.msra.mxu0 %v582
    %730 = vmatprep.subr.mxu0 0.0
    %731 = vmatpush1.msra.mxu0 %v579
    %732 = vmatprep.subr.mxu0 0.0
    %733 = vmatpush1.msra.mxu0 %v574
    %734 = vmatprep.subr.mxu0 0.0
    %735 = vmatpush1.msra.mxu0 %v571
    %736 = vmatprep.subr.mxu0 0.0
    %737 = vmatpush2.msra.mxu0 0.0
    %738 = vmatprep.subr.mxu0 0.0
    %739 = vmatpush2.msra.mxu0 0.0
    %740 = vmatprep.subr.mxu0 0.0
    %741 = vmatpush2.msra.mxu0 0.0
    %742 = vmatprep.subr.mxu0 0.0
    %743 = vmatpush2.msra.mxu0 0.0
    %744 = vmatprep.subr.mxu0 0.0
    %745 = vmatpush2.msra.mxu0 0.0
    %746 = vmatprep.subr.mxu0 0.0
    %747 = vmatpush2.msra.mxu0 0.0
    %748 = vmatprep.subr.mxu0 0.0
    %749 = vmatpush2.msra.mxu0 0.0
    %750 = vmatprep.subr.mxu0 0.0
    %751 = vmatpush2.msra.mxu0 0.0
    %752 = vmatprep.subr.mxu0 0.0
    %753 = vmatpush2.msra.mxu0 0.0
    %754 = vmatprep.subr.mxu0 0.0
    %755 = vmatpush2.msra.mxu0 0.0
    %756 = vmatprep.subr.mxu0 0.0
    %757 = vmatpush2.msra.mxu0 0.0
    %758 = vmatprep.subr.mxu0 0.0
    %759 = vmatpush2.msra.mxu0 0.0
    %760 = vmatprep.subr.mxu0 0.0
    %761 = vmatpush2.msra.mxu0 0.0
    %762 = vmatprep.subr.mxu0 0.0
    %763 = vmatpush2.msra.mxu0 0.0
    %764 = vmatprep.subr.mxu0 0.0
    %765 = vmatpush2.msra.mxu0 0.0
    %766 = vmatprep.subr.mxu0 0.0
    %767 = vmatpush2.msra.mxu0 0.0
    %768 = vmatprep.mubr.f32.mxu0 0.0
    %769 = vmatmul.mubr.f32.gmra.mxu0 %v693
    %v770 = vpop.f32.mrf.mxu0
    %v771 = vadd.f32 0.0, %v770
    %v772 = vpop.f32.mrf.mxu0
    %773 = vmatprep.mubr.f32.mxu0 0.0
    %774 = vmatmul.mubr.f32.gmra.mxu0 %v696
    %v775 = vpop.f32.mrf.mxu0
    %v776 = vadd.f32 0.0, %v775
    %v777 = vpop.f32.mrf.mxu0
    %778 = vmatprep.mubr.f32.mxu0 0.0
    %779 = vmatmul.mubr.f32.gmra.mxu0 %v699
    %v780 = vpop.f32.mrf.mxu0
    %v781 = vadd.f32 0.0, %v780
    %v782 = vpop.f32.mrf.mxu0
    %783 = vmatprep.mubr.f32.mxu0 0.0
    %784 = vmatmul.mubr.f32.gmra.mxu0 %v702
    %v785 = vpop.f32.mrf.mxu0
    %v786 = vadd.f32 0.0, %v785
    %v787 = vpop.f32.mrf.mxu0
    %788 = vdwg.mxu0
    %v789 = vadd.f32 %v669, %v771
    %v790 = vadd.f32 %v674, %v776
    %v791 = vadd.f32 %v679, %v781
    %v792 = vadd.f32 %v684, %v786
    %v793 = vadd.f32 %v789, %v290
    %v794 = vadd.f32 %v790, %v294
    %v795 = vadd.f32 %v791, %v300
    %v796 = vadd.f32 %v792, %v304
    %v797 = vld [vmem:[%s5] sm:$0x1]
    %v799 = vlaneseq
    %v800 = vshrl.u32 %v799, 7
    %v801 = vsub.s32 0, %v800
    %v802 = vrot.slane %v797, %v801
    %v804 = vadd.f32 %v793, %v802
    %v805 = vadd.f32 %v794, %v802
    %v806 = vadd.f32 %v795, %v802
    %v807 = vadd.f32 %v796, %v802
    %v808 = vmax.f32 %v804, 0.0
    %v809 = vmax.f32 %v805, 0.0
    %v810 = vmax.f32 %v806, 0.0
    %v811 = vmax.f32 %v807, 0.0
    %812 = vst [vmem:[#allocation10] sm:$0xff] %v808
    %813 = vst [vmem:[#allocation10 + $0x8] sm:$0xff] %v809
    %814 = vst [vmem:[#allocation10 + $0x10] sm:$0xff] %v810
    %815 = vst [vmem:[#allocation10 + $0x18] sm:$0xff] %v811
    // Predicated region
    $region42: #{tpu_custom_call.1} parent=1 // pred_check
      _
    $region43: #{tpu_custom_call.1} parent=1 // pred_check_branch
      %817 = sbr.rel (0) target = $region45
    $region44: #{tpu_custom_call.1} parent=1 // pred_region
      %s819 = ssub.s32 512, 512
      %820 = vsyncadd [#allocation4], %s819
      %s821 = sshll.u32 [#allocation10], 4
      %s822 = int_to_ptr.vmem [resolvable:$true] %s821
      %827 = dma.vmem_to_hbm [thread:$0]  %s822, 512, %s6, [#allocation4], 128, 128, 8
    $region45: #{tpu_custom_call.1} parent=1 // pred_fallthru
      _
    // Predicated region
    $region46: #{tpu_custom_call.1} parent=1 // pred_check
      _
    $region47: #{tpu_custom_call.1} parent=1 // pred_check_branch
      %829 = sbr.rel (0) target = $region49
    $region48: #{tpu_custom_call.1} parent=1 // pred_region
      %830 = dma.done [#allocation4], 512
    $region49: #{tpu_custom_call.1} parent=1 // pred_fallthru
      _
    %831 = vsyncpa [#allocation3], 1
    %832 = vsyncpa [#allocation6], 1
    %833 = vsyncpa [#allocation9], 1
    %834 = vsyncpa [#allocation4], 1

</llo_original>
